<compile_context>
chip_gen: v7x
topology: tpu7x:2x2x1
jax: 0.10.0
libtpu: 0.0.40
codegen_flags: <defaults>
</compile_context>

<pallas_src>
import functools
import math

import jax
import jax.numpy as jnp
from jax import lax
from jax.experimental import pallas as pl
from jax.experimental.pallas import tpu as pltpu


_NEG_BIG = -1e30  # large finite negative instead of -inf (padding-safe)


def _round_up(x, m):
    return (x + m - 1) // m * m


def _bcast(a, ncols):
    """Make a lane-replicated (rows, W) array broadcastable against (rows, ncols)."""
    if a.shape[-1] == ncols:
        return a
    return a[:, :1]


# -----------------------------------------------------------------------------
# Fused projection + flash attention kernel (online softmax, causal).
# -----------------------------------------------------------------------------
def _fused_attn_kernel(xq_ref, xkv_ref, wq_ref, wkv_ref, o_ref,
                       q_sc, m_sc, l_sc, acc_sc, *, dk_pad):
    tq = xq_ref.shape[1]
    tkv = xkv_ref.shape[1]
    qi = pl.program_id(1)
    ki = pl.program_id(2)

    @pl.when(ki == 0)
    def _():
        m_sc[...] = jnp.full_like(m_sc, _NEG_BIG)
        l_sc[...] = jnp.zeros_like(l_sc)
        acc_sc[...] = jnp.zeros_like(acc_sc)
        # Project the q tile once per q tile (1/sqrt(dk) already folded into wq).
        q_sc[...] = jnp.dot(xq_ref[0], wq_ref[...],
                            preferred_element_type=jnp.float32)

    # Skip kv tiles strictly above the causal diagonal for this q tile.
    # (Their DMA is also skipped: the kv index_map clamps to the last visible
    #  tile, so the block index does not change and nothing is re-fetched.)
    @pl.when(ki * tkv <= qi * tq + (tq - 1))
    def _():
        # Project K and V for this kv tile with a single wide MXU pass.
        kv = jnp.dot(xkv_ref[0], wkv_ref[...],
                     preferred_element_type=jnp.float32)       # (tkv, DKp+DVp)
        k = kv[:, :dk_pad]                                     # (tkv, DKp)
        v = kv[:, dk_pad:]                                     # (tkv, DVp)

        # Contract last dims directly (no k.T / XLU transpose).
        s = lax.dot_general(q_sc[...], k, (((1,), (1,)), ((), ())),
                            preferred_element_type=jnp.float32)  # (tq, tkv)

        # Causal mask (also covers zero-padded key columns for valid rows).
        row = qi * tq + lax.broadcasted_iota(jnp.int32, (tq, tkv), 0)
        col = ki * tkv + lax.broadcasted_iota(jnp.int32, (tq, tkv), 1)
        mask = col > row
        s = jnp.where(mask, _NEG_BIG, s)

        m_prev = m_sc[...]                                     # (tq, 128)
        m_new = jnp.maximum(m_prev, jnp.max(s, axis=-1, keepdims=True))
        alpha = jnp.exp(m_prev - m_new)                        # (tq, 128)
        p = jnp.exp(s - _bcast(m_new, s.shape[-1]))            # (tq, tkv)
        p = jnp.where(mask, 0.0, p)                            # hazard/padding guard
        l_sc[...] = alpha * l_sc[...] + jnp.sum(p, axis=-1, keepdims=True)
        acc_sc[...] = (_bcast(alpha, acc_sc.shape[-1]) * acc_sc[...]
                       + jnp.dot(p, v, preferred_element_type=jnp.float32))
        m_sc[...] = m_new

    @pl.when(ki == pl.num_programs(2) - 1)
    def _():
        # Exact divide (runs once per q tile; approx reciprocal not worth it).
        o_ref[0] = (acc_sc[...] /
                    _bcast(l_sc[...], acc_sc.shape[-1])).astype(o_ref.dtype)


# -----------------------------------------------------------------------------
# Wrapper matching the PyTorch module's forward (eval mode).
# -----------------------------------------------------------------------------
def single_head_attention(x, wq, wk, wv):
    """x: (B, T, D); wq/wk: (dk, D); wv: (dv, D)  (PyTorch nn.Linear layout)."""
    B, T, D = x.shape
    dk = wq.shape[0]
    dv = wv.shape[0]
    dtype = x.dtype

    # Lane-dense padding of all feature dims to multiples of 128.
    Dp = _round_up(D, 128)
    DKp = _round_up(dk, 128)
    DVp = _round_up(dv, 128)

    # Tile selection: 256x128 for long sequences (fills 256-wide MXU on
    # v6e/v7x and halves K/V re-reads), 128x128 for medium, full (8-aligned)
    # sequence for toy shapes.
    if T >= 256:
        tq, tkv = 256, 128
    elif T >= 128:
        tq, tkv = 128, 128
    else:
        tq = tkv = _round_up(T, 8)
    T_pad = _round_up(T, tq)

    # Zero-pad x; padded rows project to zero and padded key columns are
    # excluded by the causal mask (and p-zeroing) for all valid query rows.
    x_pad = jnp.zeros((B, T_pad, Dp), dtype=dtype).at[:, :T, :D].set(x)

    # Transpose weights to (in, out), fold 1/sqrt(dk) into wq, zero-pad,
    # concatenate K/V weights so the kernel does one wide MXU pass per kv tile.
    scale = 1.0 / math.sqrt(dk)
    wq_t = jnp.zeros((Dp, DKp), dtype=dtype).at[:D, :dk].set((wq.T * scale).astype(dtype))
    wk_t = jnp.zeros((Dp, DKp), dtype=dtype).at[:D, :dk].set(wk.T.astype(dtype))
    wv_t = jnp.zeros((Dp, DVp), dtype=dtype).at[:D, :dv].set(wv.T.astype(dtype))
    wkv_t = jnp.concatenate([wk_t, wv_t], axis=1)          # (Dp, DKp+DVp)

    # Clamp the kv block index to the last causally visible tile so the
    # pipeline never fetches upper-triangle tiles (same block index as the
    # previous step => no DMA).
    ratio = tq // tkv
    kv_index = lambda b, qi, ki: (b, jnp.minimum(ki, qi * ratio + (ratio - 1)), 0)

    kernel = functools.partial(_fused_attn_kernel, dk_pad=DKp)

    out = pl.pallas_call(
        kernel,
        out_shape=jax.ShapeDtypeStruct((B, T_pad, DVp), dtype),
        grid_spec=pltpu.PrefetchScalarGridSpec(
            num_scalar_prefetch=0,
            grid=(B, T_pad // tq, T_pad // tkv),
            in_specs=[
                pl.BlockSpec((1, tq, Dp), lambda b, qi, ki: (b, qi, 0)),   # x (q side)
                pl.BlockSpec((1, tkv, Dp), kv_index),                      # x (kv side)
                pl.BlockSpec((Dp, DKp), lambda b, qi, ki: (0, 0)),         # wq (scaled)
                pl.BlockSpec((Dp, DKp + DVp), lambda b, qi, ki: (0, 0)),   # [wk|wv]
            ],
            out_specs=pl.BlockSpec((1, tq, DVp), lambda b, qi, ki: (b, qi, 0)),
            scratch_shapes=[
                pltpu.VMEM((tq, DKp), jnp.float32),    # projected q tile
                pltpu.VMEM((tq, 128), jnp.float32),    # running max (lane-replicated)
                pltpu.VMEM((tq, 128), jnp.float32),    # running denom (lane-replicated)
                pltpu.VMEM((tq, DVp), jnp.float32),    # unnormalized output acc
            ],
        ),
        compiler_params=pltpu.CompilerParams(
            dimension_semantics=("parallel", "parallel", "arbitrary")),
    )(x_pad, x_pad, wq_t, wkv_t)

    # Strip sequence/feature padding back to the module's output shape.
    return out[:, :T, :dv]


def reference(x, wq, wk, wv):
    """Pure-JAX reference matching the PyTorch forward (eval mode)."""
    dk = wq.shape[0]
    q = (x @ wq.T) / math.sqrt(dk)
    k = x @ wk.T
    v = x @ wv.T
    s = jnp.einsum("btd,bsd->bts", q, k)
    T = x.shape[1]
    mask = jnp.triu(jnp.ones((T, T), dtype=bool), k=1)
    s = jnp.where(mask[None], -jnp.inf, s)
    p = jax.nn.softmax(s, axis=-1)
    return p @ v


if __name__ == "__main__":
    key = jax.random.PRNGKey(0)

    def make_case(key, B, T, D, DK, DV):
        kx, kq, kk, kv = jax.random.split(key, 4)
        x = jax.random.normal(kx, (B, T, D), dtype=jnp.float32)
        bound = 1.0 / math.sqrt(D)
        wq = jax.random.uniform(kq, (DK, D), minval=-bound, maxval=bound, dtype=jnp.float32)
        wk = jax.random.uniform(kk, (DK, D), minval=-bound, maxval=bound, dtype=jnp.float32)
        wv = jax.random.uniform(kv, (DV, D), minval=-bound, maxval=bound, dtype=jnp.float32)
        return x, wq, wk, wv

    # Small shapes consistent with the module: B=2, T=8 tokens, D=32 input dim,
    # output_key_query_dim=16, output_value_dim=16.
    k0, k1 = jax.random.split(key)
    x, wq, wk, wv = make_case(k0, B=2, T=8, D=32, DK=16, DV=16)
    out = jax.block_until_ready(single_head_attention(x, wq, wk, wv))
    ref = reference(x, wq, wk, wv)
    assert out.shape == (2, 8, 16), out.shape
    assert jnp.allclose(out, ref, atol=2e-3, rtol=2e-3), float(jnp.max(jnp.abs(out - ref)))

    # Larger case exercising the tiled (tq=256, tkv=128) path, the clamped
    # causal kv index_map, and sequence padding (T not a multiple of the tile).
    x2, wq2, wk2, wv2 = make_case(k1, B=2, T=300, D=32, DK=16, DV=16)
    out2 = jax.block_until_ready(single_head_attention(x2, wq2, wk2, wv2))
    ref2 = reference(x2, wq2, wk2, wv2)
    assert out2.shape == (2, 300, 16), out2.shape
    assert jnp.allclose(out2, ref2, atol=2e-3, rtol=2e-3), float(jnp.max(jnp.abs(out2 - ref2)))

    print("KERNEL_OK")
</pallas_src>

<mosaic_0001>
module attributes {stable_mosaic.version = 11 : i64} {
  func.func @_fused_attn_kernel(%arg0: i32, %arg1: i32, %arg2: i32, %arg3: memref<1x8x128xf32, #tpu.memory_space<vmem>>, %arg4: memref<1x8x128xf32, #tpu.memory_space<vmem>>, %arg5: memref<128x128xf32, #tpu.memory_space<vmem>>, %arg6: memref<128x256xf32, #tpu.memory_space<vmem>>, %arg7: memref<1x8x128xf32, #tpu.memory_space<vmem>>, %arg8: memref<8x128xf32, #tpu.memory_space<vmem>>, %arg9: memref<8x128xf32, #tpu.memory_space<vmem>>, %arg10: memref<8x128xf32, #tpu.memory_space<vmem>>, %arg11: memref<8x128xf32, #tpu.memory_space<vmem>>) attributes {dimension_semantics = [#tpu.dimension_semantics<parallel>, #tpu.dimension_semantics<parallel>, #tpu.dimension_semantics<arbitrary>], iteration_bounds = array<i64: 2, 1, 1>, scalar_prefetch = 0 : i64, scratch_operands = 4 : i64, tpu.core_type = #tpu.core_type<tc>, window_params = [{transform_indices = @transform_0, window_bounds = array<i64: 1, 8, 128>}, {transform_indices = @transform_1, window_bounds = array<i64: 1, 8, 128>}, {pipeline_mode = #tpu.pipeline_mode<synchronous>, transform_indices = @transform_2, window_bounds = array<i64: 128, 128>}, {pipeline_mode = #tpu.pipeline_mode<synchronous>, transform_indices = @transform_3, window_bounds = array<i64: 128, 256>}, {transform_indices = @transform_4, window_bounds = array<i64: 1, 8, 128>}]} {
    %c0_i32 = arith.constant 0 : i32
    %0 = arith.cmpi eq, %arg2, %c0_i32 : i32
    %1 = arith.extui %0 : i1 to i32
    %c0_i32_0 = arith.constant 0 : i32
    %2 = arith.cmpi ne, %1, %c0_i32_0 : i32
    scf.if %2 {
      %cst = arith.constant -1.000000e+30 : f32
      %12 = vector.broadcast %cst : f32 to vector<8x128xf32>
      %c0 = arith.constant 0 : index
      %c0_5 = arith.constant 0 : index
      %13 = vector.load %arg9[%c0, %c0_5] : memref<8x128xf32, #tpu.memory_space<vmem>>, vector<8x128xf32>
      tpu.vector_store %arg9[%c0, %c0_5], %12 {strides = array<i32>} : memref<8x128xf32, #tpu.memory_space<vmem>>, vector<8x128xf32>,
      %cst_6 = arith.constant 0.000000e+00 : f32
      %14 = vector.broadcast %cst_6 : f32 to vector<8x128xf32>
      %c0_7 = arith.constant 0 : index
      %c0_8 = arith.constant 0 : index
      %15 = vector.load %arg10[%c0_7, %c0_8] : memref<8x128xf32, #tpu.memory_space<vmem>>, vector<8x128xf32>
      tpu.vector_store %arg10[%c0_7, %c0_8], %14 {strides = array<i32>} : memref<8x128xf32, #tpu.memory_space<vmem>>, vector<8x128xf32>,
      %cst_9 = arith.constant 0.000000e+00 : f32
      %16 = vector.broadcast %cst_9 : f32 to vector<8x128xf32>
      %c0_10 = arith.constant 0 : index
      %c0_11 = arith.constant 0 : index
      %17 = vector.load %arg11[%c0_10, %c0_11] : memref<8x128xf32, #tpu.memory_space<vmem>>, vector<8x128xf32>
      tpu.vector_store %arg11[%c0_10, %c0_11], %16 {strides = array<i32>} : memref<8x128xf32, #tpu.memory_space<vmem>>, vector<8x128xf32>,
      %c0_12 = arith.constant 0 : index
      %c0_13 = arith.constant 0 : index
      %c0_14 = arith.constant 0 : index
      %18 = vector.load %arg3[%c0_12, %c0_13, %c0_14] : memref<1x8x128xf32, #tpu.memory_space<vmem>>, vector<1x8x128xf32>
      %19 = vector.shape_cast %18 : vector<1x8x128xf32> to vector<8x128xf32>
      %c0_15 = arith.constant 0 : index
      %c0_16 = arith.constant 0 : index
      %20 = vector.load %arg5[%c0_15, %c0_16] : memref<128x128xf32, #tpu.memory_space<vmem>>, vector<128x128xf32>
      %cst_17 = arith.constant dense<0.000000e+00> : vector<8x128xf32>
      %21 = tpu.matmul %19, %20, %cst_17 {dimension_numbers = #tpu.dot_dimension_numbers<[1], [0], [0], [1], [0, 0, 1, 1], [], []>} : vector<8x128xf32>, vector<128x128xf32>, vector<8x128xf32> -> vector<8x128xf32>
      %c0_18 = arith.constant 0 : index
      %c0_19 = arith.constant 0 : index
      %22 = vector.load %arg8[%c0_18, %c0_19] : memref<8x128xf32, #tpu.memory_space<vmem>>, vector<8x128xf32>
      tpu.vector_store %arg8[%c0_18, %c0_19], %21 {strides = array<i32>} : memref<8x128xf32, #tpu.memory_space<vmem>>, vector<8x128xf32>,
    } else {
    }
    %c8_i32 = arith.constant 8 : i32
    %3 = arith.muli %arg2, %c8_i32 : i32
    %c8_i32_1 = arith.constant 8 : i32
    %4 = arith.muli %arg1, %c8_i32_1 : i32
    %c7_i32 = arith.constant 7 : i32
    %5 = arith.addi %4, %c7_i32 : i32
    %6 = arith.cmpi sle, %3, %5 : i32
    %7 = arith.extui %6 : i1 to i32
    %c0_i32_2 = arith.constant 0 : i32
    %8 = arith.cmpi ne, %7, %c0_i32_2 : i32
    scf.if %8 {
      %c0 = arith.constant 0 : index
      %c0_5 = arith.constant 0 : index
      %c0_6 = arith.constant 0 : index
      %12 = vector.load %arg4[%c0, %c0_5, %c0_6] : memref<1x8x128xf32, #tpu.memory_space<vmem>>, vector<1x8x128xf32>
      %13 = vector.shape_cast %12 : vector<1x8x128xf32> to vector<8x128xf32>
      %c0_7 = arith.constant 0 : index
      %c0_8 = arith.constant 0 : index
      %14 = vector.load %arg6[%c0_7, %c0_8] : memref<128x256xf32, #tpu.memory_space<vmem>>, vector<128x256xf32>
      %cst = arith.constant dense<0.000000e+00> : vector<8x256xf32>
      %15 = tpu.matmul %13, %14, %cst {dimension_numbers = #tpu.dot_dimension_numbers<[1], [0], [0], [1], [0, 0, 1, 1], [], []>} : vector<8x128xf32>, vector<128x256xf32>, vector<8x256xf32> -> vector<8x256xf32>
      %16 = vector.extract_strided_slice %15 {offsets = [0, 0], sizes = [8, 128], strides = [1, 1]} : vector<8x256xf32> to vector<8x128xf32>
      %17 = vector.extract_strided_slice %15 {offsets = [0, 128], sizes = [8, 128], strides = [1, 1]} : vector<8x256xf32> to vector<8x128xf32>
      %c0_9 = arith.constant 0 : index
      %c0_10 = arith.constant 0 : index
      %18 = vector.load %arg8[%c0_9, %c0_10] : memref<8x128xf32, #tpu.memory_space<vmem>>, vector<8x128xf32>
      %cst_11 = arith.constant dense<0.000000e+00> : vector<8x8xf32>
      %19 = tpu.matmul %18, %16, %cst_11 {dimension_numbers = #tpu.dot_dimension_numbers<[1], [1], [0], [0], [0, 0, 1, 0], [], []>} : vector<8x128xf32>, vector<8x128xf32>, vector<8x8xf32> -> vector<8x8xf32>
      %c8_i32_12 = arith.constant 8 : i32
      %20 = arith.muli %arg1, %c8_i32_12 : i32
      %21 = tpu.iota {dimensions = array<i32: 0>} : vector<8x8xi32>
      %22 = vector.broadcast %20 : i32 to vector<8x8xi32>
      %23 = arith.addi %22, %21 : vector<8x8xi32>
      %c8_i32_13 = arith.constant 8 : i32
      %24 = arith.muli %arg2, %c8_i32_13 : i32
      %25 = tpu.iota {dimensions = array<i32: 1>} : vector<8x8xi32>
      %26 = vector.broadcast %24 : i32 to vector<8x8xi32>
      %27 = arith.addi %26, %25 : vector<8x8xi32>
      %28 = arith.cmpi sgt, %27, %23 : vector<8x8xi32>
      %cst_14 = arith.constant -1.000000e+30 : f32
      %29 = vector.broadcast %cst_14 : f32 to vector<8x8xf32>
      %30 = arith.select %28, %29, %19 : vector<8x8xi1>, vector<8x8xf32>
      %c0_15 = arith.constant 0 : index
      %c0_16 = arith.constant 0 : index
      %31 = vector.load %arg9[%c0_15, %c0_16] : memref<8x128xf32, #tpu.memory_space<vmem>>, vector<8x128xf32>
      %cst_17 = arith.constant dense<0xFF800000> : vector<8xf32>
      %32 = vector.multi_reduction <maximumf>, %30, %cst_17 [1] : vector<8x8xf32> to vector<8xf32>
      %33 = vector.shape_cast %32 : vector<8xf32> to vector<8x1xf32>
      %34 = vector.broadcast %33 : vector<8x1xf32> to vector<8x128xf32>
      %35 = arith.maximumf %31, %34 : vector<8x128xf32>
      %36 = arith.subf %31, %35 : vector<8x128xf32>
      %37 = math.exp %36 : vector<8x128xf32>
      %38 = vector.extract_strided_slice %35 {offsets = [0, 0], sizes = [8, 1], strides = [1, 1]} : vector<8x128xf32> to vector<8x1xf32>
      %39 = vector.broadcast %38 : vector<8x1xf32> to vector<8x8xf32>
      %40 = arith.subf %30, %39 : vector<8x8xf32>
      %41 = math.exp %40 : vector<8x8xf32>
      %cst_18 = arith.constant 0.000000e+00 : f32
      %42 = vector.broadcast %cst_18 : f32 to vector<8x8xf32>
      %43 = arith.select %28, %42, %41 : vector<8x8xi1>, vector<8x8xf32>
      %c0_19 = arith.constant 0 : index
      %c0_20 = arith.constant 0 : index
      %44 = vector.load %arg10[%c0_19, %c0_20] : memref<8x128xf32, #tpu.memory_space<vmem>>, vector<8x128xf32>
      %45 = arith.mulf %37, %44 : vector<8x128xf32>
      %cst_21 = arith.constant dense<0.000000e+00> : vector<8xf32>
      %46 = vector.multi_reduction <add>, %43, %cst_21 [1] : vector<8x8xf32> to vector<8xf32>
      %47 = vector.shape_cast %46 : vector<8xf32> to vector<8x1xf32>
      %48 = vector.broadcast %47 : vector<8x1xf32> to vector<8x128xf32>
      %49 = arith.addf %45, %48 : vector<8x128xf32>
      %c0_22 = arith.constant 0 : index
      %c0_23 = arith.constant 0 : index
      %50 = vector.load %arg10[%c0_22, %c0_23] : memref<8x128xf32, #tpu.memory_space<vmem>>, vector<8x128xf32>
      tpu.vector_store %arg10[%c0_22, %c0_23], %49 {strides = array<i32>} : memref<8x128xf32, #tpu.memory_space<vmem>>, vector<8x128xf32>,
      %c0_24 = arith.constant 0 : index
      %c0_25 = arith.constant 0 : index
      %51 = vector.load %arg11[%c0_24, %c0_25] : memref<8x128xf32, #tpu.memory_space<vmem>>, vector<8x128xf32>
      %52 = arith.mulf %37, %51 : vector<8x128xf32>
      %cst_26 = arith.constant dense<0.000000e+00> : vector<8x128xf32>
      %53 = tpu.matmul %43, %17, %cst_26 {dimension_numbers = #tpu.dot_dimension_numbers<[1], [0], [0], [1], [0, 0, 1, 1], [], []>} : vector<8x8xf32>, vector<8x128xf32>, vector<8x128xf32> -> vector<8x128xf32>
      %54 = arith.addf %52, %53 : vector<8x128xf32>
      %c0_27 = arith.constant 0 : index
      %c0_28 = arith.constant 0 : index
      %55 = vector.load %arg11[%c0_27, %c0_28] : memref<8x128xf32, #tpu.memory_space<vmem>>, vector<8x128xf32>
      tpu.vector_store %arg11[%c0_27, %c0_28], %54 {strides = array<i32>} : memref<8x128xf32, #tpu.memory_space<vmem>>, vector<8x128xf32>,
      %c0_29 = arith.constant 0 : index
      %c0_30 = arith.constant 0 : index
      %56 = vector.load %arg9[%c0_29, %c0_30] : memref<8x128xf32, #tpu.memory_space<vmem>>, vector<8x128xf32>
      tpu.vector_store %arg9[%c0_29, %c0_30], %35 {strides = array<i32>} : memref<8x128xf32, #tpu.memory_space<vmem>>, vector<8x128xf32>,
    } else {
    }
    %c0_i32_3 = arith.constant 0 : i32
    %9 = arith.cmpi eq, %arg2, %c0_i32_3 : i32
    %10 = arith.extui %9 : i1 to i32
    %c0_i32_4 = arith.constant 0 : i32
    %11 = arith.cmpi ne, %10, %c0_i32_4 : i32
    scf.if %11 {
      %c0 = arith.constant 0 : index
      %c0_5 = arith.constant 0 : index
      %12 = vector.load %arg11[%c0, %c0_5] : memref<8x128xf32, #tpu.memory_space<vmem>>, vector<8x128xf32>
      %c0_6 = arith.constant 0 : index
      %c0_7 = arith.constant 0 : index
      %13 = vector.load %arg10[%c0_6, %c0_7] : memref<8x128xf32, #tpu.memory_space<vmem>>, vector<8x128xf32>
      %14 = arith.divf %12, %13 : vector<8x128xf32>
      %c0_8 = arith.constant 0 : index
      %c0_9 = arith.constant 0 : index
      %c0_10 = arith.constant 0 : index
      %15 = vector.load %arg7[%c0_8, %c0_9, %c0_10] : memref<1x8x128xf32, #tpu.memory_space<vmem>>, vector<1x8x128xf32>
      %16 = vector.shape_cast %15 : vector<1x8x128xf32> to vector<8x128xf32>
      %17 = vector.shape_cast %14 : vector<8x128xf32> to vector<1x8x128xf32>
      tpu.vector_store %arg7[%c0_8, %c0_9, %c0_10], %17 {strides = array<i32>} : memref<1x8x128xf32, #tpu.memory_space<vmem>>, vector<1x8x128xf32>,
    } else {
    }
    return
  }
  func.func @transform_0(%arg0: i32, %arg1: i32, %arg2: i32) -> (i32, i32, i32) {
    %c0_i32 = arith.constant 0 : i32
    %c0_i32_0 = arith.constant 0 : i32
    return %arg0, %arg1, %c0_i32 : i32, i32, i32
  }
  func.func @transform_1(%arg0: i32, %arg1: i32, %arg2: i32) -> (i32, i32, i32) {
    %c1_i32 = arith.constant 1 : i32
    %0 = arith.muli %arg1, %c1_i32 : i32
    %c0_i32 = arith.constant 0 : i32
    %1 = arith.addi %0, %c0_i32 : i32
    %2 = arith.minsi %arg2, %1 : i32
    %c0_i32_0 = arith.constant 0 : i32
    %c0_i32_1 = arith.constant 0 : i32
    return %arg0, %2, %c0_i32_0 : i32, i32, i32
  }
  func.func @transform_2(%arg0: i32, %arg1: i32, %arg2: i32) -> (i32, i32) {
    %c0_i32 = arith.constant 0 : i32
    %c0_i32_0 = arith.constant 0 : i32
    %c0_i32_1 = arith.constant 0 : i32
    return %c0_i32, %c0_i32_0 : i32, i32
  }
  func.func @transform_3(%arg0: i32, %arg1: i32, %arg2: i32) -> (i32, i32) {
    %c0_i32 = arith.constant 0 : i32
    %c0_i32_0 = arith.constant 0 : i32
    %c0_i32_1 = arith.constant 0 : i32
    return %c0_i32, %c0_i32_0 : i32, i32
  }
  func.func @transform_4(%arg0: i32, %arg1: i32, %arg2: i32) -> (i32, i32, i32) {
    %c0_i32 = arith.constant 0 : i32
    %c0_i32_0 = arith.constant 0 : i32
    return %arg0, %arg1, %c0_i32 : i32, i32, i32
  }
}

</mosaic_0001>

<llo_original>
// kernel: tpu_custom_call.1
$region0: #{tpu_custom_call.1}
  #allocation0 [shape = 'u32[]', space=smem, size = 0x4, offset = 0x4, fixed_abs, tag = 'smem constant byte address 0x4 - core index']
  #allocation1 [shape = 'u32[144,128]{1,0:T(1,128)}', space=vmem, size = 0x12000, scoped, tag = 'internal scratch']
  #allocation2 [shape = 'f32[8,128]{1,0:T(8,128)}', space=vmem, size = 0x1000, scoped, tag = 'scratch operand']
  #allocation3 [shape = 'f32[8,128]{1,0:T(8,128)}', space=vmem, size = 0x1000, scoped, tag = 'scratch operand']
  #allocation4 [shape = 'f32[8,128]{1,0:T(8,128)}', space=vmem, size = 0x1000, scoped, tag = 'scratch operand']
  #allocation5 [shape = 'f32[8,128]{1,0:T(8,128)}', space=vmem, size = 0x1000, scoped, tag = 'scratch operand']
  %s0 = inlined_call_operand.hbm [shape: f32[2,8,128], index: 0, kind: input, shape index: {}]
  %s1 = inlined_call_operand.hbm [shape: f32[2,8,128], index: 1, kind: input, shape index: {}]
  %s2 = inlined_call_operand.hbm [shape: f32[128,128], index: 2, kind: input, shape index: {}]
  %s3 = inlined_call_operand.hbm [shape: f32[128,256], index: 3, kind: input, shape index: {}]
  %s4 = inlined_call_operand.hbm [shape: f32[2,8,128], index: 4, kind: output, shape index: {}]
  %s5 = sld [smem:[#allocation0]]
  $region77: #{tpu_custom_call.1} parent=0
    _
  %s7 = ssub.s32 1, %s5
  %s8 = scalar_select 0, %s7, %s5
  $region1: #{tpu_custom_call.1} parent=0
    #allocation6 [shape = 'u8[8192]{0}', space=vmem, size = 0x2000, scoped, tag = 'input window, operand 0']
    #allocation7 [shape = 's32[2]{0}', space=sflag, size = 0x8, scoped, tag = 'scoped memory for tpu_custom_call.1']
    #allocation8 [shape = 's32[2]{0}', space=sflag, size = 0x8, scoped, tag = 'scoped memory for tpu_custom_call.1']
    #allocation9 [shape = 'u8[8192]{0}', space=vmem, size = 0x2000, scoped, tag = 'input window, operand 1']
    #allocation10 [shape = 's32[2]{0}', space=sflag, size = 0x8, scoped, tag = 'scoped memory for tpu_custom_call.1']
    #allocation11 [shape = 'u8[65536]{0}', space=vmem, size = 0x10000, scoped, tag = 'input window, operand 2, single buffered']
    #allocation12 [shape = 'u8[131072]{0}', space=vmem, size = 0x20000, scoped, tag = 'input window, operand 3, single buffered']
    #allocation13 [shape = 's32[1]{0}', space=sflag, size = 0x4, scoped, tag = 'scoped memory for tpu_custom_call.1']
    #allocation14 [shape = 'u8[8192]{0}', space=vmem, size = 0x2000, scoped, tag = 'output window, operand 0']
    %9 = vsyncpa [#allocation7], 0
    %s10 = scalar_lea.sflag [#allocation7], 1
    %11 = vsyncpa %s10, 0
    %12 = vsyncpa [#allocation10], 0
    %s13 = scalar_lea.sflag [#allocation10], 1
    %14 = vsyncpa %s13, 0
    %15 = vsyncpa [#allocation13], 0
    %16 = vsyncpa [#allocation8], 0
    %s17 = scalar_lea.sflag [#allocation8], 1
    %18 = vsyncpa %s17, 0
    loop: start=0, step=1, limit=4
    $region2: #{tpu_custom_call.1} parent=1 // loop_pre_header
      _
    $region3: #{tpu_custom_call.1} parent=1 // loop_header
      %s20 = sphi 0, %s24
      %p21 = scmp.ge.s32.totalorder %s20, 4
      %s27 = sphi 0, %s46
      %s28 = sphi 0, %s42
      %s29 = sphi 0, %s38
      %s30 = sphi 0, %s27
      %s31 = sphi 0, %s28
      %s32 = sphi 0, %s29
      %s33 = sphi 0, %s30
      %s34 = sphi 0, %s31
      %s35 = sphi 0, %s32
      %s51 = sphi 0, %s53
      %s54 = sphi 0, %s51
      %s55 = sphi 0, %s54
      %s71 = sphi 0, %s55
      %s83 = sphi 0, %s85
      %s86 = sphi 0, %s83
      %s87 = sphi 0, %s86
      %s103 = sphi 0, %s87
      %s107 = sphi 0, %s107
      %s109 = sphi 0, %s107
      %s110 = sphi 0, %s109
      %s124 = sphi 0, %s110
      %s128 = sphi 0, %s128
      %s130 = sphi 0, %s128
      %s131 = sphi 0, %s130
      %s145 = sphi 0, %s131
      %s153 = sphi 0, %s155
      %s156 = sphi 0, %s153
      %s157 = sphi 0, %s156
      %s173 = sphi 0, %s157
    $region4: #{tpu_custom_call.1} parent=1 // loop_header_branch
      %23 = sbr.rel (%p21) target = $region8
    $region5: #{tpu_custom_call.1} parent=1 // loop_body
      %s25 = ssub.s32 %s20, 1
      %s26 = ssub.s32 %s20, 2
      %s36 = sadd.s32 1, %s29
      %p37 = scmp.ge.s32.totalorder %s36, 1
      %s38 = scalar_select %p37, 0, %s36
      %s39 = sadd.s32 1, %s28
      %s40 = scalar_select %p37, %s39, %s28
      %p41 = scmp.ge.s32.totalorder %s40, 1
      %s42 = scalar_select %p41, 0, %s40
      %s43 = sadd.s32 1, %s27
      %s44 = scalar_select %p41, %s43, %s27
      %p45 = scmp.ge.s32.totalorder %s44, 2
      %s46 = scalar_select %p45, 0, %s44
      %s47 = ssub.s32 %s27, %s46
      %s48 = ssub.s32 %s28, %s42
      %s49 = sor.u32 %s47, %s48
      %p50 = scmp.eq.s32.totalorder %s49, 0
      %s52 = sadd.s32 %s51, 1
      %s53 = scalar_select %p50, %s51, %s52
      %p56 = pneg %p50
      %p57 = scmp.eq.s32.totalorder %s20, 1
      %p58 = por %p56, %p57
      %p59 = scmp.ne.s32.totalorder %s51, %s54
      %p60 = scmp.eq.s32.totalorder %s20, 0
      %p61 = por %p59, %p60
      %p62 = scmp.ne.s32.totalorder %s51, %s54
      %p63 = scmp.eq.s32.totalorder %s25, 1
      %p64 = por %p62, %p63
      %p65 = scmp.ne.s32.totalorder %s54, %s55
      %p66 = scmp.eq.s32.totalorder %s25, 0
      %p67 = por %p65, %p66
      %p68 = scmp.ne.s32.totalorder %s54, %s55
      %p69 = scmp.eq.s32.totalorder %s26, 1
      %p70 = por %p68, %p69
      %p72 = scmp.ne.s32.totalorder %s55, %s71
      %p73 = scmp.eq.s32.totalorder %s26, 0
      %p74 = por %p72, %p73
      %p75 = scmp.lt.s32.totalorder %s29, %s28
      %s76 = scalar_select %p75, %s29, %s28
      %p77 = scmp.lt.s32.totalorder %s38, %s42
      %s78 = scalar_select %p77, %s38, %s42
      %s79 = ssub.s32 %s27, %s46
      %s80 = ssub.s32 %s76, %s78
      %s81 = sor.u32 %s79, %s80
      %p82 = scmp.eq.s32.totalorder %s81, 0
      %s84 = sadd.s32 %s83, 1
      %s85 = scalar_select %p82, %s83, %s84
      %p88 = pneg %p82
      %p89 = scmp.eq.s32.totalorder %s20, 1
      %p90 = por %p88, %p89
      %p91 = scmp.ne.s32.totalorder %s83, %s86
      %p92 = scmp.eq.s32.totalorder %s20, 0
      %p93 = por %p91, %p92
      %p94 = scmp.ne.s32.totalorder %s83, %s86
      %p95 = scmp.eq.s32.totalorder %s25, 1
      %p96 = por %p94, %p95
      %p97 = scmp.ne.s32.totalorder %s86, %s87
      %p98 = scmp.eq.s32.totalorder %s25, 0
      %p99 = por %p97, %p98
      %p100 = scmp.ne.s32.totalorder %s86, %s87
      %p101 = scmp.eq.s32.totalorder %s26, 1
      %p102 = por %p100, %p101
      %p104 = scmp.ne.s32.totalorder %s87, %s103
      %p105 = scmp.eq.s32.totalorder %s26, 0
      %p106 = por %p104, %p105
      %s108 = sadd.s32 %s107, 1
      %p111 = scmp.eq.s32.totalorder %s20, 1
      %p112 = scmp.ne.s32.totalorder %s107, %s109
      %p113 = scmp.eq.s32.totalorder %s20, 0
      %p114 = por %p112, %p113
      %p115 = scmp.ne.s32.totalorder %s107, %s109
      %p116 = scmp.eq.s32.totalorder %s25, 1
      %p117 = por %p115, %p116
      %p118 = scmp.ne.s32.totalorder %s109, %s110
      %p119 = scmp.eq.s32.totalorder %s25, 0
      %p120 = por %p118, %p119
      %p121 = scmp.ne.s32.totalorder %s109, %s110
      %p122 = scmp.eq.s32.totalorder %s26, 1
      %p123 = por %p121, %p122
      %p125 = scmp.ne.s32.totalorder %s110, %s124
      %p126 = scmp.eq.s32.totalorder %s26, 0
      %p127 = por %p125, %p126
      %s129 = sadd.s32 %s128, 1
      %p132 = scmp.eq.s32.totalorder %s20, 1
      %p133 = scmp.ne.s32.totalorder %s128, %s130
      %p134 = scmp.eq.s32.totalorder %s20, 0
      %p135 = por %p133, %p134
      %p136 = scmp.ne.s32.totalorder %s128, %s130
      %p137 = scmp.eq.s32.totalorder %s25, 1
      %p138 = por %p136, %p137
      %p139 = scmp.ne.s32.totalorder %s130, %s131
      %p140 = scmp.eq.s32.totalorder %s25, 0
      %p141 = por %p139, %p140
      %p142 = scmp.ne.s32.totalorder %s130, %s131
      %p143 = scmp.eq.s32.totalorder %s26, 1
      %p144 = por %p142, %p143
      %p146 = scmp.ne.s32.totalorder %s131, %s145
      %p147 = scmp.eq.s32.totalorder %s26, 0
      %p148 = por %p146, %p147
      %s149 = ssub.s32 %s27, %s46
      %s150 = ssub.s32 %s28, %s42
      %s151 = sor.u32 %s149, %s150
      %p152 = scmp.eq.s32.totalorder %s151, 0
      %s154 = sadd.s32 %s153, 1
      %s155 = scalar_select %p152, %s153, %s154
      %p158 = pneg %p152
      %p159 = scmp.eq.s32.totalorder %s20, 1
      %p160 = por %p158, %p159
      %p161 = scmp.ne.s32.totalorder %s153, %s156
      %p162 = scmp.eq.s32.totalorder %s20, 0
      %p163 = por %p161, %p162
      %p164 = scmp.ne.s32.totalorder %s153, %s156
      %p165 = scmp.eq.s32.totalorder %s25, 1
      %p166 = por %p164, %p165
      %p167 = scmp.ne.s32.totalorder %s156, %s157
      %p168 = scmp.eq.s32.totalorder %s25, 0
      %p169 = por %p167, %p168
      %p170 = scmp.ne.s32.totalorder %s156, %s157
      %p171 = scmp.eq.s32.totalorder %s26, 1
      %p172 = por %p170, %p171
      %p174 = scmp.ne.s32.totalorder %s157, %s173
      %p175 = scmp.eq.s32.totalorder %s26, 0
      %p176 = por %p174, %p175
      %p177 = scmp.le.s32.totalorder 1, %s20
      %p178 = scmp.lt.s32.totalorder %s20, 3
      %p179 = pnand %p177, %p178
      %p180 = pneg %p179
      // Predicated region
      $region9: #{tpu_custom_call.1} parent=5 // pred_check
        _
      $region10: #{tpu_custom_call.1} parent=5 // pred_check_branch
        %182 = sbr.rel (%p179) target = $region12
      $region11: #{tpu_custom_call.1} parent=5 // pred_region
        %s183 = ssub.s32 %s20, 1
        // Predicated region
        $region13: #{tpu_custom_call.1} parent=11 // pred_check
          %p184 = pneg %p120
        $region14: #{tpu_custom_call.1} parent=11 // pred_check_branch
          %186 = sbr.rel (%p184) target = $region16
        $region15: #{tpu_custom_call.1} parent=11 // pred_region
          %s188 = ssub.s32 2048, 2048
          %189 = vsyncadd [#allocation10], %s188
          %s190 = sshll.u32 [#allocation11], 4
          %s191 = int_to_ptr.vmem [resolvable:$true] %s190
          %196 = dma.hbm_to_vmem [thread:$0]  %s2, 2048, %s191, [#allocation10], 128, 128, 8
        $region16: #{tpu_custom_call.1} parent=11 // pred_fallthru
          _
        // Predicated region
        $region17: #{tpu_custom_call.1} parent=11 // pred_check
          %p197 = pneg %p141
        $region18: #{tpu_custom_call.1} parent=11 // pred_check_branch
          %199 = sbr.rel (%p197) target = $region20
        $region19: #{tpu_custom_call.1} parent=11 // pred_region
          %s201 = ssub.s32 4096, 4096
          %202 = vsyncadd [#allocation13], %s201
          %s203 = sshll.u32 [#allocation12], 4
          %s204 = int_to_ptr.vmem [resolvable:$true] %s203
          %209 = dma.hbm_to_vmem [thread:$0]  %s3, 4096, %s204, [#allocation13], 256, 256, 16
        $region20: #{tpu_custom_call.1} parent=11 // pred_fallthru
          _
      $region12: #{tpu_custom_call.1} parent=5 // pred_fallthru
        _
      %p210 = scmp.lt.s32.totalorder %s20, 2
      // Predicated region
      $region21: #{tpu_custom_call.1} parent=5 // pred_check
        %p211 = pneg %p210
      $region22: #{tpu_custom_call.1} parent=5 // pred_check_branch
        %213 = sbr.rel (%p211) target = $region24
      $region23: #{tpu_custom_call.1} parent=5 // pred_region
        // Predicated region
        $region25: #{tpu_custom_call.1} parent=23 // pred_check
          %p214 = pneg %p61
        $region26: #{tpu_custom_call.1} parent=23 // pred_check_branch
          %216 = sbr.rel (%p214) target = $region28
        $region27: #{tpu_custom_call.1} parent=23 // pred_region
          %s217 = sand.u32 %s51, 1
          %s218 = scalar_lea.sflag [#allocation7], %s217
          %s219 = sand.u32 %s51, 1
          %s220 = smul.addr %s219, 8
          %s221 = scalar_lea.vmem [#allocation6], %s220
          %s223 = ssub.s32 128, 128
          %224 = vsyncadd %s218, %s223
          %s225 = sadd.s32 %s28, %s27
          %s226 = smul.addr %s225, 128
          %s227 = scalar_lea.hbm %s0, %s226
          %s229 = sshll.u32 %s221, 4
          %s230 = int_to_ptr.vmem [resolvable:$true] %s229
          %232 = dma.hbm_to_vmem [thread:$0]  %s227, 128, %s230, %s218
        $region28: #{tpu_custom_call.1} parent=23 // pred_fallthru
          _
        // Predicated region
        $region29: #{tpu_custom_call.1} parent=23 // pred_check
          %p233 = pneg %p93
        $region30: #{tpu_custom_call.1} parent=23 // pred_check_branch
          %235 = sbr.rel (%p233) target = $region32
        $region31: #{tpu_custom_call.1} parent=23 // pred_region
          %s236 = sand.u32 %s20, 1
          %s237 = scalar_lea.sflag [#allocation10], %s236
          %s238 = sand.u32 %s83, 1
          %s239 = smul.addr %s238, 8
          %s240 = scalar_lea.vmem [#allocation9], %s239
          %p241 = scmp.lt.s32.totalorder %s29, %s28
          %s242 = scalar_select %p241, %s29, %s28
          %s244 = ssub.s32 128, 128
          %245 = vsyncadd %s237, %s244
          %s246 = sadd.s32 %s242, %s27
          %s247 = smul.addr %s246, 128
          %s248 = scalar_lea.hbm %s1, %s247
          %s250 = sshll.u32 %s240, 4
          %s251 = int_to_ptr.vmem [resolvable:$true] %s250
          %253 = dma.hbm_to_vmem [thread:$0]  %s248, 128, %s251, %s237
        $region32: #{tpu_custom_call.1} parent=23 // pred_fallthru
          _
      $region24: #{tpu_custom_call.1} parent=5 // pred_fallthru
        _
      %p254 = scmp.le.s32.totalorder 1, %s20
      %p255 = scmp.lt.s32.totalorder %s20, 3
      %p256 = pnand %p254, %p255
      %p257 = pneg %p256
      // Predicated region
      $region33: #{tpu_custom_call.1} parent=5 // pred_check
        _
      $region34: #{tpu_custom_call.1} parent=5 // pred_check_branch
        %259 = sbr.rel (%p256) target = $region36
      $region35: #{tpu_custom_call.1} parent=5 // pred_region
        %s260 = ssub.s32 %s20, 1
        %s261 = sand.u32 %s54, 1
        %s262 = scalar_lea.sflag [#allocation7], %s261
        %s263 = sand.u32 %s54, 1
        %s264 = smul.addr %s263, 8
        %s265 = scalar_lea.vmem [#allocation6], %s264
        // Predicated region
        $region37: #{tpu_custom_call.1} parent=35 // pred_check
          %p266 = pneg %p67
        $region38: #{tpu_custom_call.1} parent=35 // pred_check_branch
          %268 = sbr.rel (%p266) target = $region40
        $region39: #{tpu_custom_call.1} parent=35 // pred_region
          %269 = dma.done %s262, 128
        $region40: #{tpu_custom_call.1} parent=35 // pred_fallthru
          _
        %s270 = sand.u32 %s25, 1
        %s271 = scalar_lea.sflag [#allocation10], %s270
        %s272 = sand.u32 %s86, 1
        %s273 = smul.addr %s272, 8
        %s274 = scalar_lea.vmem [#allocation9], %s273
        // Predicated region
        $region41: #{tpu_custom_call.1} parent=35 // pred_check
          %p275 = pneg %p99
        $region42: #{tpu_custom_call.1} parent=35 // pred_check_branch
          %277 = sbr.rel (%p275) target = $region44
        $region43: #{tpu_custom_call.1} parent=35 // pred_region
          %278 = dma.done %s271, 128
        $region44: #{tpu_custom_call.1} parent=35 // pred_fallthru
          _
        // Predicated region
        $region45: #{tpu_custom_call.1} parent=35 // pred_check
          %p279 = pneg %p120
        $region46: #{tpu_custom_call.1} parent=35 // pred_check_branch
          %281 = sbr.rel (%p279) target = $region48
        $region47: #{tpu_custom_call.1} parent=35 // pred_region
          %282 = dma.done [#allocation10], 2048
        $region48: #{tpu_custom_call.1} parent=35 // pred_fallthru
          _
        // Predicated region
        $region49: #{tpu_custom_call.1} parent=35 // pred_check
          %p283 = pneg %p141
        $region50: #{tpu_custom_call.1} parent=35 // pred_check_branch
          %285 = sbr.rel (%p283) target = $region52
        $region51: #{tpu_custom_call.1} parent=35 // pred_region
          %286 = dma.done [#allocation13], 4096
        $region52: #{tpu_custom_call.1} parent=35 // pred_fallthru
          _
        %s287 = sand.u32 %s54, 1
        %s288 = scalar_lea.sflag [#allocation7], %s287
        %s289 = sand.u32 %s54, 1
        %s290 = smul.addr %s289, 8
        %s291 = scalar_lea.vmem [#allocation6], %s290
        %p292 = pneg %p67
        %p293 = pneg %p64
        %s294 = sand.u32 %s25, 1
        %s295 = scalar_lea.sflag [#allocation10], %s294
        %s296 = sand.u32 %s86, 1
        %s297 = smul.addr %s296, 8
        %s298 = scalar_lea.vmem [#allocation9], %s297
        %p299 = pneg %p99
        %p300 = pneg %p96
        %p301 = pneg %p120
        %p302 = pneg %p117
        %p303 = pneg %p141
        %p304 = pneg %p138
        %p305 = pneg %p169
        %p306 = pneg %p166
        %s307 = sand.u32 %s156, 1
        %s308 = scalar_lea.sflag [#allocation8], %s307
        %s309 = sand.u32 %s156, 1
        %s310 = smul.addr %s309, 8
        %s311 = scalar_lea.vmem [#allocation14], %s310
        %p312 = scmp.lt.s32.totalorder %s32, %s31
        %s313 = scalar_select %p312, %s32, %s31
        %p314 = scmp.eq.s32.totalorder %s32, 0
        // Predicated region
        $region53: #{tpu_custom_call.1} parent=35 // pred_check
          %p315 = pneg %p314
        $region54: #{tpu_custom_call.1} parent=35 // pred_check_branch
          %317 = sbr.rel (%p315) target = $region56
        $region55: #{tpu_custom_call.1} parent=35 // pred_region
          %318 = vst [vmem:[#allocation3] sm:$0xff] -1e+30
          %319 = vst [vmem:[#allocation4] sm:$0xff] 0.0
          %320 = vst [vmem:[#allocation5] sm:$0xff] 0.0
          %v321 = vld [vmem:[%s265] sm:$0xff]
          %v322 = vld [vmem:[#allocation11] sm:$0xff]
          %v323 = vld [vmem:[#allocation11 + $0x8] sm:$0xff]
          %v324 = vld [vmem:[#allocation11 + $0x10] sm:$0xff]
          %v325 = vld [vmem:[#allocation11 + $0x18] sm:$0xff]
          %v326 = vld [vmem:[#allocation11 + $0x20] sm:$0xff]
          %v327 = vld [vmem:[#allocation11 + $0x28] sm:$0xff]
          %v328 = vld [vmem:[#allocation11 + $0x30] sm:$0xff]
          %v329 = vld [vmem:[#allocation11 + $0x38] sm:$0xff]
          %v330 = vld [vmem:[#allocation11 + $0x40] sm:$0xff]
          %v331 = vld [vmem:[#allocation11 + $0x48] sm:$0xff]
          %v332 = vld [vmem:[#allocation11 + $0x50] sm:$0xff]
          %v333 = vld [vmem:[#allocation11 + $0x58] sm:$0xff]
          %v334 = vld [vmem:[#allocation11 + $0x60] sm:$0xff]
          %v335 = vld [vmem:[#allocation11 + $0x68] sm:$0xff]
          %v336 = vld [vmem:[#allocation11 + $0x70] sm:$0xff]
          %v337 = vld [vmem:[#allocation11 + $0x78] sm:$0xff]
          %338 = vmatprep.subr.mxu0 0.0
          %339 = vmatpush1.msra.mxu0 %v322
          %340 = vmatprep.subr.mxu0 0.0
          %341 = vmatpush1.msra.mxu0 %v323
          %342 = vmatprep.subr.mxu0 0.0
          %343 = vmatpush1.msra.mxu0 %v324
          %344 = vmatprep.subr.mxu0 0.0
          %345 = vmatpush1.msra.mxu0 %v325
          %346 = vmatprep.subr.mxu0 0.0
          %347 = vmatpush1.msra.mxu0 %v326
          %348 = vmatprep.subr.mxu0 0.0
          %349 = vmatpush1.msra.mxu0 %v327
          %350 = vmatprep.subr.mxu0 0.0
          %351 = vmatpush1.msra.mxu0 %v328
          %352 = vmatprep.subr.mxu0 0.0
          %353 = vmatpush1.msra.mxu0 %v329
          %354 = vmatprep.subr.mxu0 0.0
          %355 = vmatpush1.msra.mxu0 %v330
          %356 = vmatprep.subr.mxu0 0.0
          %357 = vmatpush1.msra.mxu0 %v331
          %358 = vmatprep.subr.mxu0 0.0
          %359 = vmatpush1.msra.mxu0 %v332
          %360 = vmatprep.subr.mxu0 0.0
          %361 = vmatpush1.msra.mxu0 %v333
          %362 = vmatprep.subr.mxu0 0.0
          %363 = vmatpush1.msra.mxu0 %v334
          %364 = vmatprep.subr.mxu0 0.0
          %365 = vmatpush1.msra.mxu0 %v335
          %366 = vmatprep.subr.mxu0 0.0
          %367 = vmatpush1.msra.mxu0 %v336
          %368 = vmatprep.subr.mxu0 0.0
          %369 = vmatpush1.msra.mxu0 %v337
          %370 = vmatprep.subr.mxu0 0.0
          %371 = vmatpush1.msra.mxu0 0.0
          %372 = vmatprep.subr.mxu0 0.0
          %373 = vmatpush1.msra.mxu0 0.0
          %374 = vmatprep.subr.mxu0 0.0
          %375 = vmatpush1.msra.mxu0 0.0
          %376 = vmatprep.subr.mxu0 0.0
          %377 = vmatpush1.msra.mxu0 0.0
          %378 = vmatprep.subr.mxu0 0.0
          %379 = vmatpush1.msra.mxu0 0.0
          %380 = vmatprep.subr.mxu0 0.0
          %381 = vmatpush1.msra.mxu0 0.0
          %382 = vmatprep.subr.mxu0 0.0
          %383 = vmatpush1.msra.mxu0 0.0
          %384 = vmatprep.subr.mxu0 0.0
          %385 = vmatpush1.msra.mxu0 0.0
          %386 = vmatprep.subr.mxu0 0.0
          %387 = vmatpush1.msra.mxu0 0.0
          %388 = vmatprep.subr.mxu0 0.0
          %389 = vmatpush1.msra.mxu0 0.0
          %390 = vmatprep.subr.mxu0 0.0
          %391 = vmatpush1.msra.mxu0 0.0
          %392 = vmatprep.subr.mxu0 0.0
          %393 = vmatpush1.msra.mxu0 0.0
          %394 = vmatprep.subr.mxu0 0.0
          %395 = vmatpush1.msra.mxu0 0.0
          %396 = vmatprep.subr.mxu0 0.0
          %397 = vmatpush1.msra.mxu0 0.0
          %398 = vmatprep.subr.mxu0 0.0
          %399 = vmatpush1.msra.mxu0 0.0
          %400 = vmatprep.subr.mxu0 0.0
          %401 = vmatpush1.msra.mxu0 0.0
          %402 = vmatprep.mubr.f32.mxu0 0.0
          %403 = vmatmul.mubr.f32.gmra.mrb[0].mxu0 %v321
          %v404 = vpop.f32.mrb[0].mxu0
          %v405 = vadd.f32 0.0, %v404
          %v406 = vpop.f32.mrb[0].mxu0
          %407 = vdwg.mxu0
          %408 = vst [vmem:[#allocation2] sm:$0xff] %v405
        $region56: #{tpu_custom_call.1} parent=35 // pred_fallthru
          _
        %s409 = smul.u32 %s32, 8
        %s410 = smul.u32 %s31, 8
        %s411 = sadd.s32 %s410, 7
        %p412 = scmp.le.s32.totalorder %s409, %s411
        // Predicated region
        $region57: #{tpu_custom_call.1} parent=35 // pred_check
          %p413 = pneg %p412
        $region58: #{tpu_custom_call.1} parent=35 // pred_check_branch
          %415 = sbr.rel (%p413) target = $region60
        $region59: #{tpu_custom_call.1} parent=35 // pred_region
          %v416 = vld [vmem:[%s274] sm:$0xff]
          %v417 = vld [vmem:[#allocation12] sm:$0xff]
          %v418 = vld [vmem:[#allocation12 + $0x8] sm:$0xff]
          %v419 = vld [vmem:[#allocation12 + $0x10] sm:$0xff]
          %v420 = vld [vmem:[#allocation12 + $0x18] sm:$0xff]
          %v421 = vld [vmem:[#allocation12 + $0x20] sm:$0xff]
          %v422 = vld [vmem:[#allocation12 + $0x28] sm:$0xff]
          %v423 = vld [vmem:[#allocation12 + $0x30] sm:$0xff]
          %v424 = vld [vmem:[#allocation12 + $0x38] sm:$0xff]
          %v425 = vld [vmem:[#allocation12 + $0x40] sm:$0xff]
          %v426 = vld [vmem:[#allocation12 + $0x48] sm:$0xff]
          %v427 = vld [vmem:[#allocation12 + $0x50] sm:$0xff]
          %v428 = vld [vmem:[#allocation12 + $0x58] sm:$0xff]
          %v429 = vld [vmem:[#allocation12 + $0x60] sm:$0xff]
          %v430 = vld [vmem:[#allocation12 + $0x68] sm:$0xff]
          %v431 = vld [vmem:[#allocation12 + $0x70] sm:$0xff]
          %v432 = vld [vmem:[#allocation12 + $0x78] sm:$0xff]
          %v433 = vld [vmem:[#allocation12 + $0x80] sm:$0xff]
          %v434 = vld [vmem:[#allocation12 + $0x88] sm:$0xff]
          %v435 = vld [vmem:[#allocation12 + $0x90] sm:$0xff]
          %v436 = vld [vmem:[#allocation12 + $0x98] sm:$0xff]
          %v437 = vld [vmem:[#allocation12 + $0xa0] sm:$0xff]
          %v438 = vld [vmem:[#allocation12 + $0xa8] sm:$0xff]
          %v439 = vld [vmem:[#allocation12 + $0xb0] sm:$0xff]
          %v440 = vld [vmem:[#allocation12 + $0xb8] sm:$0xff]
          %v441 = vld [vmem:[#allocation12 + $0xc0] sm:$0xff]
          %v442 = vld [vmem:[#allocation12 + $0xc8] sm:$0xff]
          %v443 = vld [vmem:[#allocation12 + $0xd0] sm:$0xff]
          %v444 = vld [vmem:[#allocation12 + $0xd8] sm:$0xff]
          %v445 = vld [vmem:[#allocation12 + $0xe0] sm:$0xff]
          %v446 = vld [vmem:[#allocation12 + $0xe8] sm:$0xff]
          %v447 = vld [vmem:[#allocation12 + $0xf0] sm:$0xff]
          %v448 = vld [vmem:[#allocation12 + $0xf8] sm:$0xff]
          %449 = vmatprep.subr.mxu0 %v418
          %450 = vmatpush1.msra.mxu0 %v417
          %451 = vmatprep.subr.mxu0 %v420
          %452 = vmatpush1.msra.mxu0 %v419
          %453 = vmatprep.subr.mxu0 %v422
          %454 = vmatpush1.msra.mxu0 %v421
          %455 = vmatprep.subr.mxu0 %v424
          %456 = vmatpush1.msra.mxu0 %v423
          %457 = vmatprep.subr.mxu0 %v426
          %458 = vmatpush1.msra.mxu0 %v425
          %459 = vmatprep.subr.mxu0 %v428
          %460 = vmatpush1.msra.mxu0 %v427
          %461 = vmatprep.subr.mxu0 %v430
          %462 = vmatpush1.msra.mxu0 %v429
          %463 = vmatprep.subr.mxu0 %v432
          %464 = vmatpush1.msra.mxu0 %v431
          %465 = vmatprep.subr.mxu0 %v434
          %466 = vmatpush1.msra.mxu0 %v433
          %467 = vmatprep.subr.mxu0 %v436
          %468 = vmatpush1.msra.mxu0 %v435
          %469 = vmatprep.subr.mxu0 %v438
          %470 = vmatpush1.msra.mxu0 %v437
          %471 = vmatprep.subr.mxu0 %v440
          %472 = vmatpush1.msra.mxu0 %v439
          %473 = vmatprep.subr.mxu0 %v442
          %474 = vmatpush1.msra.mxu0 %v441
          %475 = vmatprep.subr.mxu0 %v444
          %476 = vmatpush1.msra.mxu0 %v443
          %477 = vmatprep.subr.mxu0 %v446
          %478 = vmatpush1.msra.mxu0 %v445
          %479 = vmatprep.subr.mxu0 %v448
          %480 = vmatpush1.msra.mxu0 %v447
          %481 = vmatprep.subr.mxu0 0.0
          %482 = vmatpush1.msra.mxu0 0.0
          %483 = vmatprep.subr.mxu0 0.0
          %484 = vmatpush1.msra.mxu0 0.0
          %485 = vmatprep.subr.mxu0 0.0
          %486 = vmatpush1.msra.mxu0 0.0
          %487 = vmatprep.subr.mxu0 0.0
          %488 = vmatpush1.msra.mxu0 0.0
          %489 = vmatprep.subr.mxu0 0.0
          %490 = vmatpush1.msra.mxu0 0.0
          %491 = vmatprep.subr.mxu0 0.0
          %492 = vmatpush1.msra.mxu0 0.0
          %493 = vmatprep.subr.mxu0 0.0
          %494 = vmatpush1.msra.mxu0 0.0
          %495 = vmatprep.subr.mxu0 0.0
          %496 = vmatpush1.msra.mxu0 0.0
          %497 = vmatprep.subr.mxu0 0.0
          %498 = vmatpush1.msra.mxu0 0.0
          %499 = vmatprep.subr.mxu0 0.0
          %500 = vmatpush1.msra.mxu0 0.0
          %501 = vmatprep.subr.mxu0 0.0
          %502 = vmatpush1.msra.mxu0 0.0
          %503 = vmatprep.subr.mxu0 0.0
          %504 = vmatpush1.msra.mxu0 0.0
          %505 = vmatprep.subr.mxu0 0.0
          %506 = vmatpush1.msra.mxu0 0.0
          %507 = vmatprep.subr.mxu0 0.0
          %508 = vmatpush1.msra.mxu0 0.0
          %509 = vmatprep.subr.mxu0 0.0
          %510 = vmatpush1.msra.mxu0 0.0
          %511 = vmatprep.subr.mxu0 0.0
          %512 = vmatpush1.msra.mxu0 0.0
          %513 = vmatprep.mubr.f32.mxu0 0.0
          %514 = vmatmul.mubr.f32.gmra.mrb[0].mxu0 %v416
          %v515 = vpop.f32.mrb[0].mxu0
          %v516 = vadd.f32 0.0, %v515
          %v517 = vpop.f32.mrb[0].mxu0
          %v518 = vadd.f32 0.0, %v517
          %519 = vdwg.mxu0
          %v520 = vld [vmem:[#allocation2] sm:$0xff]
          %521 = vmatprep.subr.mxu0 0.0
          %522 = vmatpush1.xpose.msra.mxu0 %v516
          %523 = vmatprep.subr.mxu0 0.0
          %524 = vmatpush1.xpose.msra.mxu0 0.0
          %525 = vmatprep.subr.mxu0 0.0
          %526 = vmatpush1.xpose.msra.mxu0 0.0
          %527 = vmatprep.subr.mxu0 0.0
          %528 = vmatpush1.xpose.msra.mxu0 0.0
          %529 = vmatprep.subr.mxu0 0.0
          %530 = vmatpush1.xpose.msra.mxu0 0.0
          %531 = vmatprep.subr.mxu0 0.0
          %532 = vmatpush1.xpose.msra.mxu0 0.0
          %533 = vmatprep.subr.mxu0 0.0
          %534 = vmatpush1.xpose.msra.mxu0 0.0
          %535 = vmatprep.subr.mxu0 0.0
          %536 = vmatpush1.xpose.msra.mxu0 0.0
          %537 = vmatprep.subr.mxu0 0.0
          %538 = vmatpush1.xpose.msra.mxu0 0.0
          %539 = vmatprep.subr.mxu0 0.0
          %540 = vmatpush1.xpose.msra.mxu0 0.0
          %541 = vmatprep.subr.mxu0 0.0
          %542 = vmatpush1.xpose.msra.mxu0 0.0
          %543 = vmatprep.subr.mxu0 0.0
          %544 = vmatpush1.xpose.msra.mxu0 0.0
          %545 = vmatprep.subr.mxu0 0.0
          %546 = vmatpush1.xpose.msra.mxu0 0.0
          %547 = vmatprep.subr.mxu0 0.0
          %548 = vmatpush1.xpose.msra.mxu0 0.0
          %549 = vmatprep.subr.mxu0 0.0
          %550 = vmatpush1.xpose.msra.mxu0 0.0
          %551 = vmatprep.subr.mxu0 0.0
          %552 = vmatpush1.xpose.msra.mxu0 0.0
          %553 = vmatprep.subr.mxu0 0.0
          %554 = vmatpush1.xpose.msra.mxu0 0.0
          %555 = vmatprep.subr.mxu0 0.0
          %556 = vmatpush1.xpose.msra.mxu0 0.0
          %557 = vmatprep.subr.mxu0 0.0
          %558 = vmatpush1.xpose.msra.mxu0 0.0
          %559 = vmatprep.subr.mxu0 0.0
          %560 = vmatpush1.xpose.msra.mxu0 0.0
          %561 = vmatprep.subr.mxu0 0.0
          %562 = vmatpush1.xpose.msra.mxu0 0.0
          %563 = vmatprep.subr.mxu0 0.0
          %564 = vmatpush1.xpose.msra.mxu0 0.0
          %565 = vmatprep.subr.mxu0 0.0
          %566 = vmatpush1.xpose.msra.mxu0 0.0
          %567 = vmatprep.subr.mxu0 0.0
          %568 = vmatpush1.xpose.msra.mxu0 0.0
          %569 = vmatprep.subr.mxu0 0.0
          %570 = vmatpush1.xpose.msra.mxu0 0.0
          %571 = vmatprep.subr.mxu0 0.0
          %572 = vmatpush1.xpose.msra.mxu0 0.0
          %573 = vmatprep.subr.mxu0 0.0
          %574 = vmatpush1.xpose.msra.mxu0 0.0
          %575 = vmatprep.subr.mxu0 0.0
          %576 = vmatpush1.xpose.msra.mxu0 0.0
          %577 = vmatprep.subr.mxu0 0.0
          %578 = vmatpush1.xpose.msra.mxu0 0.0
          %579 = vmatprep.subr.mxu0 0.0
          %580 = vmatpush1.xpose.msra.mxu0 0.0
          %581 = vmatprep.subr.mxu0 0.0
          %582 = vmatpush1.xpose.msra.mxu0 0.0
          %583 = vmatprep.subr.mxu0 0.0
          %584 = vmatpush1.xpose.msra.mxu0 0.0
          %585 = vmatprep.mubr.f32.mxu0 0.0
          %586 = vmatmul.mubr.f32.gmra.mrb[0].mxu0 %v520
          %v587 = vpop.f32.mrb[0].mxu0
          %v588 = vadd.f32 0.0, %v587
          %v589 = vpop.f32.mrb[0].mxu0
          %590 = vdwg.mxu0
          %v591 = vlaneseq
          %v592 = vshrl.u32 %v591, 7
          %v593 = vstv %s410
          %v594 = vadd.s32 %v593, %v592
          %v595 = vlaneseq
          %v596 = vand.u32 %v595, 127
          %v597 = vstv %s409
          %v598 = vadd.s32 %v597, %v596
          %vm599 = vcmp.gt.s32.totalorder %v598, %v594
          %v600 = vsel %vm599, -1e+30, %v588
          %v601 = vld [vmem:[#allocation3] sm:$0xff]
          %vm602 = vcmask 64512
          %v603 = vsel %vm602, %v600, -inf
          %604 = vmax.xlane.f32.xlu0 %v603
          %v605 = vpop.xlane.xlu0 %604
          %v606 = vmax.f32 %v601, %v605
          %v607 = vsub.f32 %v601, %v606
          %v608 = vmul.f32 %v607, 1.442695
          %v609 = vpow.pop %v608
          %611 = vset.pattern.permute.xlu0 0
          %612 = vperm.xlu0 %611, %v606
          %v613 = vpop.permute.xlu0 %612
          %v615 = vsub.f32 %v600, %v613
          %v616 = vmul.f32 %v615, 1.442695
          %v617 = vpow.pop %v616
          %v618 = vsel %vm599, 0.0, %v617
          %v619 = vld [vmem:[#allocation4] sm:$0xff]
          %v620 = vmul.f32 %v609, %v619
          %v621 = vsel %vm602, %v618, 0.0
          %622 = vadd.xlane.f32.xlu0 %v621
          %v623 = vpop.xlane.xlu0 %622
          %v624 = vadd.f32 %v620, %v623
          %625 = vst [vmem:[#allocation4] sm:$0xff] %v624
          %v626 = vld [vmem:[#allocation5] sm:$0xff]
          %v627 = vmul.f32 %v609, %v626
          %v629 = vsel %vm602, %v618, 0
          %631 = vmatprep.subr.mxu0 0.0
          %632 = vmatpush1.msra.mxu0 %v518
          %633 = vmatprep.subr.mxu0 0.0
          %634 = vmatpush1.msra.mxu0 0.0
          %635 = vmatprep.subr.mxu0 0.0
          %636 = vmatpush1.msra.mxu0 0.0
          %637 = vmatprep.subr.mxu0 0.0
          %638 = vmatpush1.msra.mxu0 0.0
          %639 = vmatprep.subr.mxu0 0.0
          %640 = vmatpush1.msra.mxu0 0.0
          %641 = vmatprep.subr.mxu0 0.0
          %642 = vmatpush1.msra.mxu0 0.0
          %643 = vmatprep.subr.mxu0 0.0
          %644 = vmatpush1.msra.mxu0 0.0
          %645 = vmatprep.subr.mxu0 0.0
          %646 = vmatpush1.msra.mxu0 0.0
          %647 = vmatprep.subr.mxu0 0.0
          %648 = vmatpush1.msra.mxu0 0.0
          %649 = vmatprep.subr.mxu0 0.0
          %650 = vmatpush1.msra.mxu0 0.0
          %651 = vmatprep.subr.mxu0 0.0
          %652 = vmatpush1.msra.mxu0 0.0
          %653 = vmatprep.subr.mxu0 0.0
          %654 = vmatpush1.msra.mxu0 0.0
          %655 = vmatprep.subr.mxu0 0.0
          %656 = vmatpush1.msra.mxu0 0.0
          %657 = vmatprep.subr.mxu0 0.0
          %658 = vmatpush1.msra.mxu0 0.0
          %659 = vmatprep.subr.mxu0 0.0
          %660 = vmatpush1.msra.mxu0 0.0
          %661 = vmatprep.subr.mxu0 0.0
          %662 = vmatpush1.msra.mxu0 0.0
          %663 = vmatprep.subr.mxu0 0.0
          %664 = vmatpush1.msra.mxu0 0.0
          %665 = vmatprep.subr.mxu0 0.0
          %666 = vmatpush1.msra.mxu0 0.0
          %667 = vmatprep.subr.mxu0 0.0
          %668 = vmatpush1.msra.mxu0 0.0
          %669 = vmatprep.subr.mxu0 0.0
          %670 = vmatpush1.msra.mxu0 0.0
          %671 = vmatprep.subr.mxu0 0.0
          %672 = vmatpush1.msra.mxu0 0.0
          %673 = vmatprep.subr.mxu0 0.0
          %674 = vmatpush1.msra.mxu0 0.0
          %675 = vmatprep.subr.mxu0 0.0
          %676 = vmatpush1.msra.mxu0 0.0
          %677 = vmatprep.subr.mxu0 0.0
          %678 = vmatpush1.msra.mxu0 0.0
          %679 = vmatprep.subr.mxu0 0.0
          %680 = vmatpush1.msra.mxu0 0.0
          %681 = vmatprep.subr.mxu0 0.0
          %682 = vmatpush1.msra.mxu0 0.0
          %683 = vmatprep.subr.mxu0 0.0
          %684 = vmatpush1.msra.mxu0 0.0
          %685 = vmatprep.subr.mxu0 0.0
          %686 = vmatpush1.msra.mxu0 0.0
          %687 = vmatprep.subr.mxu0 0.0
          %688 = vmatpush1.msra.mxu0 0.0
          %689 = vmatprep.subr.mxu0 0.0
          %690 = vmatpush1.msra.mxu0 0.0
          %691 = vmatprep.subr.mxu0 0.0
          %692 = vmatpush1.msra.mxu0 0.0
          %693 = vmatprep.subr.mxu0 0.0
          %694 = vmatpush1.msra.mxu0 0.0
          %695 = vmatprep.mubr.f32.mxu0 0.0
          %696 = vmatmul.mubr.f32.gmra.mrb[0].mxu0 %v629
          %v697 = vpop.f32.mrb[0].mxu0
          %v698 = vadd.f32 0.0, %v697
          %v699 = vpop.f32.mrb[0].mxu0
          %700 = vdwg.mxu0
          %v701 = vadd.f32 %v627, %v698
          %702 = vst [vmem:[#allocation5] sm:$0xff] %v701
          %703 = vst [vmem:[#allocation3] sm:$0xff] %v606
        $region60: #{tpu_custom_call.1} parent=35 // pred_fallthru
          _
        // Predicated region
        $region61: #{tpu_custom_call.1} parent=35 // pred_check
          %p704 = pneg %p314
        $region62: #{tpu_custom_call.1} parent=35 // pred_check_branch
          %706 = sbr.rel (%p704) target = $region64
        $region63: #{tpu_custom_call.1} parent=35 // pred_region
          %v707 = vld [vmem:[#allocation5] sm:$0xff]
          %v708 = vld [vmem:[#allocation4] sm:$0xff]
          %v709 = vrcp.pop %v708
          %v710 = vmul.f32 %v707, %v709
          %711 = vst [vmem:[%s311] sm:$0xff] %v710
        $region64: #{tpu_custom_call.1} parent=35 // pred_fallthru
          _
        %s712 = sand.u32 %s156, 1
        %s713 = scalar_lea.sflag [#allocation8], %s712
        %s714 = sand.u32 %s156, 1
        %s715 = smul.addr %s714, 8
        %s716 = scalar_lea.vmem [#allocation14], %s715
        // Predicated region
        $region65: #{tpu_custom_call.1} parent=35 // pred_check
          %p717 = pneg %p166
        $region66: #{tpu_custom_call.1} parent=35 // pred_check_branch
          %719 = sbr.rel (%p717) target = $region68
        $region67: #{tpu_custom_call.1} parent=35 // pred_region
          %s721 = ssub.s32 128, 128
          %722 = vsyncadd %s713, %s721
          %s723 = sadd.s32 %s31, %s30
          %s724 = smul.addr %s723, 128
          %s725 = scalar_lea.hbm %s4, %s724
          %s727 = sshll.u32 %s716, 4
          %s728 = int_to_ptr.vmem [resolvable:$true] %s727
          %730 = dma.vmem_to_hbm [thread:$0]  %s728, 128, %s725, %s713
        $region68: #{tpu_custom_call.1} parent=35 // pred_fallthru
          _
      $region36: #{tpu_custom_call.1} parent=5 // pred_fallthru
        _
      %p731 = scmp.le.s32.totalorder 2, %s20
      // Predicated region
      $region69: #{tpu_custom_call.1} parent=5 // pred_check
        %p732 = pneg %p731
      $region70: #{tpu_custom_call.1} parent=5 // pred_check_branch
        %734 = sbr.rel (%p732) target = $region72
      $region71: #{tpu_custom_call.1} parent=5 // pred_region
        %s735 = ssub.s32 %s20, 2
        // Predicated region
        $region73: #{tpu_custom_call.1} parent=71 // pred_check
          %p736 = pneg %p172
        $region74: #{tpu_custom_call.1} parent=71 // pred_check_branch
          %738 = sbr.rel (%p736) target = $region76
        $region75: #{tpu_custom_call.1} parent=71 // pred_region
          %s739 = sand.u32 %s157, 1
          %s740 = scalar_lea.sflag [#allocation8], %s739
          %s741 = sand.u32 %s157, 1
          %s742 = smul.addr %s741, 8
          %s743 = scalar_lea.vmem [#allocation14], %s742
          %744 = dma.done %s740, 128
        $region76: #{tpu_custom_call.1} parent=71 // pred_fallthru
          _
      $region72: #{tpu_custom_call.1} parent=5 // pred_fallthru
        _
    $region6: #{tpu_custom_call.1} parent=1 // loop_footer
      %s24 = sadd.s32 1, %s20
    $region7: #{tpu_custom_call.1} parent=1 // loop_footer_branch
      %19 = sbr.rel target = $region3
    $region8: #{tpu_custom_call.1} parent=1 // loop_exit
      _
    %745 = vsyncpa [#allocation7], 1
    %s746 = scalar_lea.sflag [#allocation7], 1
    %747 = vsyncpa %s746, 1
    %748 = vsyncpa [#allocation10], 1
    %s749 = scalar_lea.sflag [#allocation10], 1
    %750 = vsyncpa %s749, 1
    %751 = vsyncpa [#allocation13], 1
    %752 = vsyncpa [#allocation8], 1
    %s753 = scalar_lea.sflag [#allocation8], 1
    %754 = vsyncpa %s753, 1

</llo_original>
